<compile_context>
chip_gen: v5e
topology: v5e:2x2
jax: 0.10.0
libtpu: 0.0.40
codegen_flags: <defaults>
</compile_context>

<pallas_src>
import math
import jax
import jax.numpy as jnp
from jax import lax
from jax.experimental import pallas as pl
from jax.experimental.pallas import tpu as pltpu


def _round_up(x, m):
    return ((x + m - 1) // m) * m


def _largest_aligned_divisor(n, target, align=128):
    """Largest divisor of n that is a multiple of `align` and <= target (None if none)."""
    best = None
    d = align
    lim = min(n, target)
    while d <= lim:
        if n % d == 0:
            best = d
        d += align
    return best


def _tpu_params():
    """(vmem_capacity_bytes, num_tensorcores) with conservative fallbacks."""
    vmem_cap = 64 << 20   # conservative fallback: v7x per-TensorCore VMEM
    num_cores = 1
    try:
        info = pltpu.get_tpu_info()
        vmem_cap = int(getattr(info, "vmem_capacity_bytes", vmem_cap))
        num_cores = int(getattr(info, "num_cores",
                                getattr(info, "tensorcores_per_chip", 1)))
    except Exception:
        pass
    return vmem_cap, num_cores


def _mlp_kernel(x_ref, w1_ref, b1_ref, w2_ref, b2_ref, o_ref, acc_ref):
    # x_ref:  (TM, C)   w1_ref: (C, TH)   b1_ref: (1, TH) f32
    # w2_ref: (TH, C)   b2_ref: (1, C) f32   o_ref: (TM, C)   acc_ref: (TM, C) f32
    h_idx = pl.program_id(1)

    x = x_ref[...]
    # First matmul + bias, f32 accumulation on the MXU.
    h = jnp.dot(x, w1_ref[...], preferred_element_type=jnp.float32) + b1_ref[...]
    # Exact (erf-based) GELU, matching torch.nn.GELU() default.
    h = 0.5 * h * (1.0 + lax.erf(h * (1.0 / math.sqrt(2.0))))
    # Second matmul: this hidden slice's contribution (f32 accumulation).
    partial = jnp.dot(h.astype(w2_ref.dtype), w2_ref[...],
                      preferred_element_type=jnp.float32)

    @pl.when(h_idx == 0)
    def _():
        acc_ref[...] = partial          # skip zero-init: first partial written directly

    @pl.when(h_idx > 0)
    def _():
        acc_ref[...] += partial

    @pl.when(h_idx == pl.num_programs(1) - 1)
    def _():
        # Dropout with p=0.0 / eval mode -> identity.
        o_ref[...] = (acc_ref[...] + b2_ref[...]).astype(o_ref.dtype)


def mlp_pallas(x, w1, b1, w2, b2, *, compute_dtype=jnp.bfloat16):
    """x: (M, C).  w1: (C, H), b1: (H,), w2: (H, C), b2: (C,)."""
    M, C = x.shape
    Cw, H = w1.shape
    assert Cw == C and w2.shape == (H, C) and b1.shape == (H,) and b2.shape == (C,)
    out_dtype = x.dtype

    vmem_cap, num_cores = _tpu_params()

    # ---- lane-dense padding of feature / hidden dims (zero-padding is exact) ----
    Cp = max(128, _round_up(C, 128))
    Hp = max(128, _round_up(H, 128))
    if Cp != C:
        x = jnp.pad(x, ((0, 0), (0, Cp - C)))
        w1 = jnp.pad(w1, ((0, Cp - C), (0, 0)))
        w2 = jnp.pad(w2, ((0, 0), (0, Cp - C)))
        b2 = jnp.pad(b2, ((0, Cp - C),))
    if Hp != H:
        w1 = jnp.pad(w1, ((0, 0), (0, Hp - H)))
        w2 = jnp.pad(w2, ((0, Hp - H), (0, 0)))
        b1 = jnp.pad(b1, ((0, Hp - H),))

    # ---- MXU-native compute dtype for activations/weights (wrapper-side cast) ----
    if compute_dtype is not None:
        cdt = jnp.dtype(compute_dtype)
        x = x.astype(cdt)
        w1 = w1.astype(cdt)
        w2 = w2.astype(cdt)
    cdt_size = jnp.dtype(x.dtype).itemsize
    out_size = jnp.dtype(out_dtype).itemsize

    b1_2d = b1.reshape(1, Hp).astype(jnp.float32)
    b2_2d = b2.reshape(1, Cp).astype(jnp.float32)

    # ---- generation-aware tile selection ----
    vmem_budget = int(vmem_cap * 0.85)
    # 128 MiB chips (v5e/v6e): tm=1024 keeps the weight stream above the MXU/HBM
    # crossover; 64 MiB (v7x): tm=512 is already compute-bound there.
    tm_pref = 1024 if vmem_cap >= (100 << 20) else 512
    tm = max(8, min(tm_pref, _round_up(M, 8)))
    tm = _round_up(tm, 8)
    th = _largest_aligned_divisor(Hp, 512) or Hp

    def footprint(tm_, th_):
        # double-buffered in/out tiles + resident f32 accumulator
        # + in-kernel (tm, th) f32 GELU intermediate / matmul temporaries.
        tiles = ((tm_ * Cp + Cp * th_ + th_ * Cp) * cdt_size
                 + (th_ + Cp) * 4
                 + tm_ * Cp * out_size)
        return 2 * tiles + tm_ * Cp * 4 + 2 * tm_ * th_ * 4

    # Shrink tiles (not just the VMEM limit) until the footprint fits.
    while footprint(tm, th) > vmem_budget:
        if tm > 256:
            tm = _round_up(tm // 2, 8)
        elif th > 128:
            th = _largest_aligned_divisor(Hp, th // 2) or 128
        else:
            break

    # Megacore (v7x): keep both TensorCores busy on the parallel M axis.
    M_pad = _round_up(M, tm)
    if num_cores >= 2 and M_pad // tm == 1 and tm > 8:
        tm = _round_up(max(8, tm // 2), 8)
        M_pad = _round_up(M, tm)

    if M_pad != M:
        x = jnp.pad(x, ((0, M_pad - M), (0, 0)))
    row_tiles = M_pad // tm

    vmem_limit = min(int(vmem_cap * 0.9),
                     max(footprint(tm, th) + (8 << 20), 32 << 20))

    # Advisory cost estimate (weights re-streamed once per row tile).
    cost = pl.CostEstimate(
        flops=int(4 * M_pad * Cp * Hp),           # two matmuls (2*M*C*H each)
        transcendentals=int(M_pad * Hp),          # erf in GELU
        bytes_accessed=int(M_pad * Cp * (cdt_size + out_size)
                           + row_tiles * (2 * Cp * Hp * cdt_size + (Hp + Cp) * 4)),
    )

    out = pl.pallas_call(
        _mlp_kernel,
        out_shape=jax.ShapeDtypeStruct((M_pad, Cp), out_dtype),
        grid_spec=pltpu.PrefetchScalarGridSpec(
            num_scalar_prefetch=0,
            grid=(row_tiles, Hp // th),
            in_specs=[
                pl.BlockSpec((tm, Cp), lambda i, h: (i, 0)),   # x row tile (resident over h)
                pl.BlockSpec((Cp, th), lambda i, h: (0, h)),   # w1 hidden slice (streamed)
                pl.BlockSpec((1, th), lambda i, h: (0, h)),    # b1 hidden slice
                pl.BlockSpec((th, Cp), lambda i, h: (h, 0)),   # w2 hidden slice (streamed)
                pl.BlockSpec((1, Cp), lambda i, h: (0, 0)),    # b2 (resident)
            ],
            out_specs=pl.BlockSpec((tm, Cp), lambda i, h: (i, 0)),
            scratch_shapes=[pltpu.VMEM((tm, Cp), jnp.float32)],
        ),
        compiler_params=pltpu.CompilerParams(
            dimension_semantics=("parallel", "arbitrary"),
            vmem_limit_bytes=int(vmem_limit),
        ),
        cost_estimate=cost,
    )(x, w1, b1_2d, w2, b2_2d)

    if M_pad != M or Cp != C:
        out = out[:M, :C]
    return out


def mlp_reference(x, w1, b1, w2, b2):
    h = x @ w1 + b1
    h = 0.5 * h * (1.0 + lax.erf(h / math.sqrt(2.0)))
    return h @ w2 + b2


if __name__ == "__main__":
    # config: n_embd=32, n_fexp=4, bias=True, dropout=0.0 (eval mode)
    batch, seq, n_embd, n_fexp = 2, 8, 32, 4
    hidden = n_fexp * n_embd  # 128

    key = jax.random.PRNGKey(0)
    kx, k1, k2, k3, k4 = jax.random.split(key, 5)

    x = jax.random.normal(kx, (batch, seq, n_embd), dtype=jnp.float32)

    # Deterministic parameter init (kernel convention: (in, out)).
    w1 = jax.random.normal(k1, (n_embd, hidden), dtype=jnp.float32) * 0.02
    b1 = jax.random.normal(k2, (hidden,), dtype=jnp.float32) * 0.02
    w2 = jax.random.normal(k3, (hidden, n_embd), dtype=jnp.float32) * 0.02
    b2 = jax.random.normal(k4, (n_embd,), dtype=jnp.float32) * 0.02

    x2d = x.reshape(batch * seq, n_embd)
    ref = mlp_reference(x2d, w1, b1, w2, b2)

    # Default path: bf16 compute on the MXU, f32 accumulation in the kernel.
    out = jax.block_until_ready(mlp_pallas(x2d, w1, b1, w2, b2))
    assert out.shape == (batch * seq, n_embd)
    assert jnp.allclose(out, ref, atol=1e-2, rtol=5e-2), "bf16-path mismatch vs reference"

    # f32 compute path: tight numerical check.
    out_f32 = jax.block_until_ready(
        mlp_pallas(x2d, w1, b1, w2, b2, compute_dtype=jnp.float32))
    assert jnp.allclose(out_f32, ref, atol=1e-5, rtol=1e-5), "f32-path mismatch vs reference"

    print("KERNEL_OK")
</pallas_src>

<mosaic_0001>
module attributes {stable_mosaic.version = 11 : i64} {
  func.func @_mlp_kernel(%arg0: i32, %arg1: i32, %arg2: memref<16x128xbf16, #tpu.memory_space<vmem>>, %arg3: memref<128x128xbf16, #tpu.memory_space<vmem>>, %arg4: memref<1x128xf32, #tpu.memory_space<vmem>>, %arg5: memref<128x128xbf16, #tpu.memory_space<vmem>>, %arg6: memref<1x128xf32, #tpu.memory_space<vmem>>, %arg7: memref<16x128xf32, #tpu.memory_space<vmem>>, %arg8: memref<16x128xf32, #tpu.memory_space<vmem>>) attributes {dimension_semantics = [#tpu.dimension_semantics<parallel>, #tpu.dimension_semantics<arbitrary>], iteration_bounds = array<i64: 1, 1>, scalar_prefetch = 0 : i64, scratch_operands = 1 : i64, tpu.core_type = #tpu.core_type<tc>, window_params = [{transform_indices = @transform_0, window_bounds = array<i64: 16, 128>}, {transform_indices = @transform_1, window_bounds = array<i64: 128, 128>}, {transform_indices = @transform_2, window_bounds = array<i64: 1, 128>}, {transform_indices = @transform_3, window_bounds = array<i64: 128, 128>}, {pipeline_mode = #tpu.pipeline_mode<synchronous>, transform_indices = @transform_4, window_bounds = array<i64: 1, 128>}, {transform_indices = @transform_5, window_bounds = array<i64: 16, 128>}]} {
    %c0 = arith.constant 0 : index
    %c0_0 = arith.constant 0 : index
    %0 = vector.load %arg2[%c0, %c0_0] : memref<16x128xbf16, #tpu.memory_space<vmem>>, vector<16x128xbf16>
    %c0_1 = arith.constant 0 : index
    %c0_2 = arith.constant 0 : index
    %1 = vector.load %arg3[%c0_1, %c0_2] : memref<128x128xbf16, #tpu.memory_space<vmem>>, vector<128x128xbf16>
    %cst = arith.constant dense<0.000000e+00> : vector<16x128xf32>
    %2 = tpu.matmul %0, %1, %cst {dimension_numbers = #tpu.dot_dimension_numbers<[1], [0], [0], [1], [0, 0, 1, 1], [], []>} : vector<16x128xbf16>, vector<128x128xbf16>, vector<16x128xf32> -> vector<16x128xf32>
    %c0_3 = arith.constant 0 : index
    %c0_4 = arith.constant 0 : index
    %3 = vector.load %arg4[%c0_3, %c0_4] : memref<1x128xf32, #tpu.memory_space<vmem>>, vector<1x128xf32>
    %4 = vector.broadcast %3 : vector<1x128xf32> to vector<16x128xf32>
    %5 = arith.addf %2, %4 : vector<16x128xf32>
    %cst_5 = arith.constant 5.000000e-01 : f32
    %6 = vector.broadcast %cst_5 : f32 to vector<16x128xf32>
    %7 = arith.mulf %6, %5 : vector<16x128xf32>
    %cst_6 = arith.constant 0.707106769 : f32
    %8 = vector.broadcast %cst_6 : f32 to vector<16x128xf32>
    %9 = arith.mulf %5, %8 : vector<16x128xf32>
    %10 = math.erf %9 : vector<16x128xf32>
    %cst_7 = arith.constant 1.000000e+00 : f32
    %11 = vector.broadcast %cst_7 : f32 to vector<16x128xf32>
    %12 = arith.addf %11, %10 : vector<16x128xf32>
    %13 = arith.mulf %7, %12 : vector<16x128xf32>
    %14 = arith.truncf %13 : vector<16x128xf32> to vector<16x128xbf16>
    %c0_8 = arith.constant 0 : index
    %c0_9 = arith.constant 0 : index
    %15 = vector.load %arg5[%c0_8, %c0_9] : memref<128x128xbf16, #tpu.memory_space<vmem>>, vector<128x128xbf16>
    %cst_10 = arith.constant dense<0.000000e+00> : vector<16x128xf32>
    %16 = tpu.matmul %14, %15, %cst_10 {dimension_numbers = #tpu.dot_dimension_numbers<[1], [0], [0], [1], [0, 0, 1, 1], [], []>} : vector<16x128xbf16>, vector<128x128xbf16>, vector<16x128xf32> -> vector<16x128xf32>
    %c0_i32 = arith.constant 0 : i32
    %17 = arith.cmpi eq, %arg1, %c0_i32 : i32
    %18 = arith.extui %17 : i1 to i32
    %c0_i32_11 = arith.constant 0 : i32
    %19 = arith.cmpi ne, %18, %c0_i32_11 : i32
    scf.if %19 {
      %c0_16 = arith.constant 0 : index
      %c0_17 = arith.constant 0 : index
      %26 = vector.load %arg8[%c0_16, %c0_17] : memref<16x128xf32, #tpu.memory_space<vmem>>, vector<16x128xf32>
      tpu.vector_store %arg8[%c0_16, %c0_17], %16 {strides = array<i32>} : memref<16x128xf32, #tpu.memory_space<vmem>>, vector<16x128xf32>,
    } else {
    }
    %c0_i32_12 = arith.constant 0 : i32
    %20 = arith.cmpi sgt, %arg1, %c0_i32_12 : i32
    %21 = arith.extui %20 : i1 to i32
    %c0_i32_13 = arith.constant 0 : i32
    %22 = arith.cmpi ne, %21, %c0_i32_13 : i32
    scf.if %22 {
      %c0_16 = arith.constant 0 : index
      %c0_17 = arith.constant 0 : index
      %26 = vector.load %arg8[%c0_16, %c0_17] : memref<16x128xf32, #tpu.memory_space<vmem>>, vector<16x128xf32>
      %27 = arith.addf %26, %16 : vector<16x128xf32>
      %c0_18 = arith.constant 0 : index
      %c0_19 = arith.constant 0 : index
      %28 = vector.load %arg8[%c0_18, %c0_19] : memref<16x128xf32, #tpu.memory_space<vmem>>, vector<16x128xf32>
      tpu.vector_store %arg8[%c0_18, %c0_19], %27 {strides = array<i32>} : memref<16x128xf32, #tpu.memory_space<vmem>>, vector<16x128xf32>,
    } else {
    }
    %c0_i32_14 = arith.constant 0 : i32
    %23 = arith.cmpi eq, %arg1, %c0_i32_14 : i32
    %24 = arith.extui %23 : i1 to i32
    %c0_i32_15 = arith.constant 0 : i32
    %25 = arith.cmpi ne, %24, %c0_i32_15 : i32
    scf.if %25 {
      %c0_16 = arith.constant 0 : index
      %c0_17 = arith.constant 0 : index
      %26 = vector.load %arg8[%c0_16, %c0_17] : memref<16x128xf32, #tpu.memory_space<vmem>>, vector<16x128xf32>
      %c0_18 = arith.constant 0 : index
      %c0_19 = arith.constant 0 : index
      %27 = vector.load %arg6[%c0_18, %c0_19] : memref<1x128xf32, #tpu.memory_space<vmem>>, vector<1x128xf32>
      %28 = vector.broadcast %27 : vector<1x128xf32> to vector<16x128xf32>
      %29 = arith.addf %26, %28 : vector<16x128xf32>
      %c0_20 = arith.constant 0 : index
      %c0_21 = arith.constant 0 : index
      %30 = vector.load %arg7[%c0_20, %c0_21] : memref<16x128xf32, #tpu.memory_space<vmem>>, vector<16x128xf32>
      tpu.vector_store %arg7[%c0_20, %c0_21], %29 {strides = array<i32>} : memref<16x128xf32, #tpu.memory_space<vmem>>, vector<16x128xf32>,
    } else {
    }
    return
  }
  func.func @transform_0(%arg0: i32, %arg1: i32) -> (i32, i32) {
    %c0_i32 = arith.constant 0 : i32
    %c0_i32_0 = arith.constant 0 : i32
    return %arg0, %c0_i32 : i32, i32
  }
  func.func @transform_1(%arg0: i32, %arg1: i32) -> (i32, i32) {
    %c0_i32 = arith.constant 0 : i32
    %c0_i32_0 = arith.constant 0 : i32
    return %c0_i32, %arg1 : i32, i32
  }
  func.func @transform_2(%arg0: i32, %arg1: i32) -> (i32, i32) {
    %c0_i32 = arith.constant 0 : i32
    %c0_i32_0 = arith.constant 0 : i32
    return %c0_i32, %arg1 : i32, i32
  }
  func.func @transform_3(%arg0: i32, %arg1: i32) -> (i32, i32) {
    %c0_i32 = arith.constant 0 : i32
    %c0_i32_0 = arith.constant 0 : i32
    return %arg1, %c0_i32 : i32, i32
  }
  func.func @transform_4(%arg0: i32, %arg1: i32) -> (i32, i32) {
    %c0_i32 = arith.constant 0 : i32
    %c0_i32_0 = arith.constant 0 : i32
    %c0_i32_1 = arith.constant 0 : i32
    return %c0_i32, %c0_i32_0 : i32, i32
  }
  func.func @transform_5(%arg0: i32, %arg1: i32) -> (i32, i32) {
    %c0_i32 = arith.constant 0 : i32
    %c0_i32_0 = arith.constant 0 : i32
    return %arg0, %c0_i32 : i32, i32
  }
}

</mosaic_0001>

<llo_original>
// kernel: tpu_custom_call.1
$region0: #{tpu_custom_call.1}
  #allocation0 [shape = 'u32[]', space=smem, size = 0x4, offset = 0x4, fixed_abs, tag = 'smem constant byte address 0x4 - core index']
  #allocation1 [shape = 'u32[72,128]{1,0:T(1,128)}', space=vmem, size = 0x9000, scoped, tag = 'internal scratch']
  #allocation2 [shape = 'f32[16,128]{1,0:T(8,128)}', space=vmem, size = 0x2000, scoped, tag = 'scratch operand']
  %s0 = inlined_call_operand.hbm [shape: bf16[16,128], index: 0, kind: input, shape index: {}]
  %s1 = inlined_call_operand.hbm [shape: bf16[128,128], index: 1, kind: input, shape index: {}]
  %s2 = inlined_call_operand.vmem [shape: f32[1,128], index: 2, kind: input, shape index: {}]
  %s3 = inlined_call_operand.hbm [shape: bf16[128,128], index: 3, kind: input, shape index: {}]
  %s4 = inlined_call_operand.vmem [shape: f32[1,128], index: 4, kind: input, shape index: {}]
  %s5 = inlined_call_operand.hbm [shape: f32[16,128], index: 5, kind: output, shape index: {}]
  %s6 = sld [smem:[#allocation0]]
  $region54: #{tpu_custom_call.1} parent=0
    _
  %s8 = ssub.s32 1, %s6
  %s9 = scalar_select 0, %s8, %s6
  $region1: #{tpu_custom_call.1} parent=0
    #allocation3 [shape = 'u8[4096]{0}', space=vmem, size = 0x1000, scoped, tag = 'input window, operand 0, single buffered']
    #allocation4 [shape = 's32[1]{0}', space=sflag, size = 0x4, scoped, tag = 'scoped memory for tpu_custom_call.1']
    #allocation5 [shape = 's32[1]{0}', space=sflag, size = 0x4, scoped, tag = 'scoped memory for tpu_custom_call.1']
    #allocation6 [shape = 'u8[32768]{0}', space=vmem, size = 0x8000, scoped, tag = 'input window, operand 1, single buffered']
    #allocation7 [shape = 's32[1]{0}', space=sflag, size = 0x4, scoped, tag = 'scoped memory for tpu_custom_call.1']
    #allocation8 [shape = 'u8[32768]{0}', space=vmem, size = 0x8000, scoped, tag = 'input window, operand 3, single buffered']
    #allocation9 [shape = 'u8[8192]{0}', space=vmem, size = 0x2000, scoped, tag = 'output window, operand 0, single buffered']
    %10 = vsyncpa [#allocation4], 0
    %11 = vsyncpa [#allocation7], 0
    %12 = vsyncpa [#allocation5], 0
    // Predicated region
    $region2: #{tpu_custom_call.1} parent=1 // pred_check
      _
    $region3: #{tpu_custom_call.1} parent=1 // pred_check_branch
      %14 = sbr.rel (0) target = $region5
    $region4: #{tpu_custom_call.1} parent=1 // pred_region
      %16 = vsyncadd [#allocation4], 0
      %s17 = sshll.u32 %s0, 4
      %s18 = int_to_ptr.hbm [resolvable:$true] %s17
      %s19 = sshll.u32 [#allocation3], 4
      %s20 = int_to_ptr.vmem [resolvable:$true] %s19
      %25 = dma.hbm_to_vmem [thread:$0]  %s18, 128, %s20, [#allocation4], 64, 64, 4
    $region5: #{tpu_custom_call.1} parent=1 // pred_fallthru
      _
    // Predicated region
    $region6: #{tpu_custom_call.1} parent=1 // pred_check
      _
    $region7: #{tpu_custom_call.1} parent=1 // pred_check_branch
      %27 = sbr.rel (0) target = $region9
    $region8: #{tpu_custom_call.1} parent=1 // pred_region
      %29 = vsyncadd [#allocation7], 0
      %s30 = sshll.u32 %s1, 4
      %s31 = int_to_ptr.hbm [resolvable:$true] %s30
      %s32 = sshll.u32 [#allocation6], 4
      %s33 = int_to_ptr.vmem [resolvable:$true] %s32
      %38 = dma.hbm_to_vmem [thread:$0]  %s31, 1024, %s33, [#allocation7], 64, 64, 4
    $region9: #{tpu_custom_call.1} parent=1 // pred_fallthru
      _
    // Predicated region
    $region10: #{tpu_custom_call.1} parent=1 // pred_check
      _
    $region11: #{tpu_custom_call.1} parent=1 // pred_check_branch
      %40 = sbr.rel (0) target = $region13
    $region12: #{tpu_custom_call.1} parent=1 // pred_region
      _
    $region13: #{tpu_custom_call.1} parent=1 // pred_fallthru
      _
    // Predicated region
    $region14: #{tpu_custom_call.1} parent=1 // pred_check
      _
    $region15: #{tpu_custom_call.1} parent=1 // pred_check_branch
      %42 = sbr.rel (0) target = $region17
    $region16: #{tpu_custom_call.1} parent=1 // pred_region
      %44 = vsyncadd [#allocation7], 0
      %s45 = sshll.u32 %s3, 4
      %s46 = int_to_ptr.hbm [resolvable:$true] %s45
      %s47 = sshll.u32 [#allocation8], 4
      %s48 = int_to_ptr.vmem [resolvable:$true] %s47
      %53 = dma.hbm_to_vmem [thread:$0]  %s46, 1024, %s48, [#allocation7], 64, 64, 4
    $region17: #{tpu_custom_call.1} parent=1 // pred_fallthru
      _
    // Predicated region
    $region18: #{tpu_custom_call.1} parent=1 // pred_check
      _
    $region19: #{tpu_custom_call.1} parent=1 // pred_check_branch
      %55 = sbr.rel (0) target = $region21
    $region20: #{tpu_custom_call.1} parent=1 // pred_region
      _
    $region21: #{tpu_custom_call.1} parent=1 // pred_fallthru
      _
    // Predicated region
    $region22: #{tpu_custom_call.1} parent=1 // pred_check
      _
    $region23: #{tpu_custom_call.1} parent=1 // pred_check_branch
      %57 = sbr.rel (0) target = $region25
    $region24: #{tpu_custom_call.1} parent=1 // pred_region
      %59 = dma.done [#allocation4], 128
    $region25: #{tpu_custom_call.1} parent=1 // pred_fallthru
      _
    // Predicated region
    $region26: #{tpu_custom_call.1} parent=1 // pred_check
      _
    $region27: #{tpu_custom_call.1} parent=1 // pred_check_branch
      %61 = sbr.rel (0) target = $region29
    $region28: #{tpu_custom_call.1} parent=1 // pred_region
      %63 = dma.done [#allocation7], 1024
    $region29: #{tpu_custom_call.1} parent=1 // pred_fallthru
      _
    // Predicated region
    $region30: #{tpu_custom_call.1} parent=1 // pred_check
      _
    $region31: #{tpu_custom_call.1} parent=1 // pred_check_branch
      %65 = sbr.rel (0) target = $region33
    $region32: #{tpu_custom_call.1} parent=1 // pred_region
      %67 = dma.done [#allocation7], 1024
    $region33: #{tpu_custom_call.1} parent=1 // pred_fallthru
      _
    %v68 = vld [vmem:[#allocation3] sm:$0xf]
    %v69 = vld [vmem:[#allocation3 + $0x4] sm:$0xf]
    %v70 = vld [vmem:[#allocation6] sm:$0xf]
    %v71 = vld [vmem:[#allocation6 + $0x4] sm:$0xf]
    %v72 = vld [vmem:[#allocation6 + $0x8] sm:$0xf]
    %v73 = vld [vmem:[#allocation6 + $0xc] sm:$0xf]
    %v74 = vld [vmem:[#allocation6 + $0x10] sm:$0xf]
    %v75 = vld [vmem:[#allocation6 + $0x14] sm:$0xf]
    %v76 = vld [vmem:[#allocation6 + $0x18] sm:$0xf]
    %v77 = vld [vmem:[#allocation6 + $0x1c] sm:$0xf]
    %v78 = vld [vmem:[#allocation6 + $0x20] sm:$0xf]
    %v79 = vld [vmem:[#allocation6 + $0x24] sm:$0xf]
    %v80 = vld [vmem:[#allocation6 + $0x28] sm:$0xf]
    %v81 = vld [vmem:[#allocation6 + $0x2c] sm:$0xf]
    %v82 = vld [vmem:[#allocation6 + $0x30] sm:$0xf]
    %v83 = vld [vmem:[#allocation6 + $0x34] sm:$0xf]
    %v84 = vld [vmem:[#allocation6 + $0x38] sm:$0xf]
    %v85 = vld [vmem:[#allocation6 + $0x3c] sm:$0xf]
    %v86 = vld [vmem:[%s2] sm:$0x1]
    %v88 = vperm.slane %v86, 0
    %v92 = vunpack.c.l.b16 %v68
    %v93 = vunpack.c.l.b16 %v69
    %v94 = vpack.c.b16 %v93, %v92
    %v112 = vunpack.c.l.b16 %v70
    %v113 = vunpack.c.l.b16 %v71
    %v114 = vunpack.c.l.b16 %v72
    %v115 = vunpack.c.l.b16 %v73
    %v116 = vunpack.c.l.b16 %v74
    %v117 = vunpack.c.l.b16 %v75
    %v118 = vunpack.c.l.b16 %v76
    %v119 = vunpack.c.l.b16 %v77
    %v120 = vunpack.c.l.b16 %v78
    %v121 = vunpack.c.l.b16 %v79
    %v122 = vunpack.c.l.b16 %v80
    %v123 = vunpack.c.l.b16 %v81
    %v124 = vunpack.c.l.b16 %v82
    %v125 = vunpack.c.l.b16 %v83
    %v126 = vunpack.c.l.b16 %v84
    %v127 = vunpack.c.l.b16 %v85
    %v128 = vpack.c.b16 %v113, %v112
    %v129 = vpack.c.b16 %v115, %v114
    %v130 = vpack.c.b16 %v117, %v116
    %v131 = vpack.c.b16 %v119, %v118
    %v132 = vpack.c.b16 %v121, %v120
    %v133 = vpack.c.b16 %v123, %v122
    %v134 = vpack.c.b16 %v125, %v124
    %v135 = vpack.c.b16 %v127, %v126
    %144 = vmatpush.bf16.msra.mxu0 %v135
    %145 = vmatpush.bf16.msra.mxu0 %v134
    %146 = vmatpush.bf16.msra.mxu0 %v133
    %147 = vmatpush.bf16.msra.mxu0 %v132
    %148 = vmatpush.bf16.msra.mxu0 %v131
    %149 = vmatpush.bf16.msra.mxu0 %v130
    %150 = vmatpush.bf16.msra.mxu0 %v129
    %151 = vmatpush.bf16.msra.mxu0 %v128
    %152 = vmatmul.bf16.gmra.mxu0 %v94
    %v153 = vpop.f32.mrf.mxu0
    %v154 = vadd.f32 %v88, %v153
    %v155 = vpop.f32.mrf.mxu0
    %v156 = vadd.f32 %v88, %v155
    %157 = vdwg.mxu0
    %v158 = vmul.f32 %v154, 0.5
    %v159 = vmul.f32 %v156, 0.5
    %v160 = vmul.f32 %v154, 0.70710677
    %v161 = vmul.f32 %v156, 0.70710677
    %v162 = vmul.f32 %v160, %v160
    %v163 = vmin.f32 16.0, %v162
    %v164 = vmul.f32 %v163, 2.1237322e-06
    %v165 = vadd.f32 %v164, 0.00028619796
    %v166 = vmul.f32 %v163, %v165
    %v167 = vadd.f32 %v166, 0.0036580483
    %v168 = vmul.f32 %v163, %v167
    %v169 = vadd.f32 %v168, 0.05243302
    %v170 = vmul.f32 %v163, %v169
    %v171 = vadd.f32 %v170, 0.18741608
    %v172 = vmul.f32 %v163, %v171
    %v173 = vadd.f32 %v172, 1.1283791
    %v174 = vmul.f32 %v160, %v173
    %v175 = vmul.f32 %v163, 3.8918573e-05
    %v176 = vadd.f32 %v175, 0.001143296
    %v177 = vmul.f32 %v163, %v176
    %v178 = vadd.f32 %v177, 0.014752088
    %v179 = vmul.f32 %v163, %v178
    %v180 = vadd.f32 %v179, 0.112945676
    %v181 = vmul.f32 %v163, %v180
    %v182 = vadd.f32 %v181, 0.4994258
    %v183 = vmul.f32 %v163, %v182
    %v184 = vadd.f32 %v183, 1.0
    %v185 = vrcp.pop %v184
    %v186 = vmul.f32 %v184, %v185
    %v187 = vsub.f32 1.0, %v186
    %v188 = vmul.f32 %v185, %v187
    %v189 = vadd.f32 %v185, %v188
    %vm190 = vweird.f32 %v184
    %vm191 = vweird.f32 %v185
    %vm192 = vmor %vm190, %vm191
    %v193 = vsel %vm192, %v185, %v189
    %v194 = vand.u32 2147483647, %v184
    %vm195 = vcmp.eq.f32.partialorder %v194, 8.507059e+37
    %v196 = vand.u32 %v184, 2147483648
    %v197 = vor.u32 1.1754944e-38, %v196
    %v198 = vsel %vm195, %v197, %v193
    %v199 = vmul.f32 %v174, %v198
    %v200 = vmin.f32 %v199, 1.0
    %v201 = vmax.f32 %v200, -1.0
    %v202 = vmul.f32 %v161, %v161
    %v203 = vmin.f32 16.0, %v202
    %v204 = vmul.f32 %v203, 2.1237322e-06
    %v205 = vadd.f32 %v204, 0.00028619796
    %v206 = vmul.f32 %v203, %v205
    %v207 = vadd.f32 %v206, 0.0036580483
    %v208 = vmul.f32 %v203, %v207
    %v209 = vadd.f32 %v208, 0.05243302
    %v210 = vmul.f32 %v203, %v209
    %v211 = vadd.f32 %v210, 0.18741608
    %v212 = vmul.f32 %v203, %v211
    %v213 = vadd.f32 %v212, 1.1283791
    %v214 = vmul.f32 %v161, %v213
    %v215 = vmul.f32 %v203, 3.8918573e-05
    %v216 = vadd.f32 %v215, 0.001143296
    %v217 = vmul.f32 %v203, %v216
    %v218 = vadd.f32 %v217, 0.014752088
    %v219 = vmul.f32 %v203, %v218
    %v220 = vadd.f32 %v219, 0.112945676
    %v221 = vmul.f32 %v203, %v220
    %v222 = vadd.f32 %v221, 0.4994258
    %v223 = vmul.f32 %v203, %v222
    %v224 = vadd.f32 %v223, 1.0
    %v225 = vrcp.pop %v224
    %v226 = vmul.f32 %v224, %v225
    %v227 = vsub.f32 1.0, %v226
    %v228 = vmul.f32 %v225, %v227
    %v229 = vadd.f32 %v225, %v228
    %vm230 = vweird.f32 %v224
    %vm231 = vweird.f32 %v225
    %vm232 = vmor %vm230, %vm231
    %v233 = vsel %vm232, %v225, %v229
    %v234 = vand.u32 2147483647, %v224
    %vm235 = vcmp.eq.f32.partialorder %v234, 8.507059e+37
    %v236 = vand.u32 %v224, 2147483648
    %v237 = vor.u32 1.1754944e-38, %v236
    %v238 = vsel %vm235, %v237, %v233
    %v239 = vmul.f32 %v214, %v238
    %v240 = vmin.f32 %v239, 1.0
    %v241 = vmax.f32 %v240, -1.0
    %v242 = vadd.f32 %v201, 1.0
    %v243 = vadd.f32 %v241, 1.0
    %v244 = vmul.f32 %v158, %v242
    %v245 = vmul.f32 %v159, %v243
    %v246 = vpack.c.bf16 %v245, %v244
    %v247 = vld [vmem:[#allocation8] sm:$0xf]
    %v248 = vld [vmem:[#allocation8 + $0x4] sm:$0xf]
    %v249 = vld [vmem:[#allocation8 + $0x8] sm:$0xf]
    %v250 = vld [vmem:[#allocation8 + $0xc] sm:$0xf]
    %v251 = vld [vmem:[#allocation8 + $0x10] sm:$0xf]
    %v252 = vld [vmem:[#allocation8 + $0x14] sm:$0xf]
    %v253 = vld [vmem:[#allocation8 + $0x18] sm:$0xf]
    %v254 = vld [vmem:[#allocation8 + $0x1c] sm:$0xf]
    %v255 = vld [vmem:[#allocation8 + $0x20] sm:$0xf]
    %v256 = vld [vmem:[#allocation8 + $0x24] sm:$0xf]
    %v257 = vld [vmem:[#allocation8 + $0x28] sm:$0xf]
    %v258 = vld [vmem:[#allocation8 + $0x2c] sm:$0xf]
    %v259 = vld [vmem:[#allocation8 + $0x30] sm:$0xf]
    %v260 = vld [vmem:[#allocation8 + $0x34] sm:$0xf]
    %v261 = vld [vmem:[#allocation8 + $0x38] sm:$0xf]
    %v262 = vld [vmem:[#allocation8 + $0x3c] sm:$0xf]
    %v279 = vunpack.c.l.b16 %v247
    %v280 = vunpack.c.l.b16 %v248
    %v281 = vunpack.c.l.b16 %v249
    %v282 = vunpack.c.l.b16 %v250
    %v283 = vunpack.c.l.b16 %v251
    %v284 = vunpack.c.l.b16 %v252
    %v285 = vunpack.c.l.b16 %v253
    %v286 = vunpack.c.l.b16 %v254
    %v287 = vunpack.c.l.b16 %v255
    %v288 = vunpack.c.l.b16 %v256
    %v289 = vunpack.c.l.b16 %v257
    %v290 = vunpack.c.l.b16 %v258
    %v291 = vunpack.c.l.b16 %v259
    %v292 = vunpack.c.l.b16 %v260
    %v293 = vunpack.c.l.b16 %v261
    %v294 = vunpack.c.l.b16 %v262
    %v295 = vpack.c.b16 %v280, %v279
    %v296 = vpack.c.b16 %v282, %v281
    %v297 = vpack.c.b16 %v284, %v283
    %v298 = vpack.c.b16 %v286, %v285
    %v299 = vpack.c.b16 %v288, %v287
    %v300 = vpack.c.b16 %v290, %v289
    %v301 = vpack.c.b16 %v292, %v291
    %v302 = vpack.c.b16 %v294, %v293
    %311 = vmatpush.bf16.msra.mxu0 %v302
    %312 = vmatpush.bf16.msra.mxu0 %v301
    %313 = vmatpush.bf16.msra.mxu0 %v300
    %314 = vmatpush.bf16.msra.mxu0 %v299
    %315 = vmatpush.bf16.msra.mxu0 %v298
    %316 = vmatpush.bf16.msra.mxu0 %v297
    %317 = vmatpush.bf16.msra.mxu0 %v296
    %318 = vmatpush.bf16.msra.mxu0 %v295
    %319 = vmatmul.bf16.gmra.mxu0 %v246
    %v320 = vpop.f32.mrf.mxu0
    %v321 = vadd.f32 0.0, %v320
    %v322 = vpop.f32.mrf.mxu0
    %v323 = vadd.f32 0.0, %v322
    %324 = vdwg.mxu0
    %p325 = scmp.eq.s32.totalorder 0, 0
    // Predicated region
    $region34: #{tpu_custom_call.1} parent=1 // pred_check
      %p326 = pneg %p325
    $region35: #{tpu_custom_call.1} parent=1 // pred_check_branch
      %328 = sbr.rel (%p326) target = $region37
    $region36: #{tpu_custom_call.1} parent=1 // pred_region
      %329 = vst [vmem:[#allocation2] sm:$0xff] %v321
      %330 = vst [vmem:[#allocation2 + $0x8] sm:$0xff] %v323
    $region37: #{tpu_custom_call.1} parent=1 // pred_fallthru
      _
    %p331 = scmp.gt.s32.totalorder 0, 0
    // Predicated region
    $region38: #{tpu_custom_call.1} parent=1 // pred_check
      %p332 = pneg %p331
    $region39: #{tpu_custom_call.1} parent=1 // pred_check_branch
      %334 = sbr.rel (%p332) target = $region41
    $region40: #{tpu_custom_call.1} parent=1 // pred_region
      %v335 = vld [vmem:[#allocation2] sm:$0xff]
      %v336 = vld [vmem:[#allocation2 + $0x8] sm:$0xff]
      %v337 = vadd.f32 %v335, %v321
      %v338 = vadd.f32 %v336, %v323
      %339 = vst [vmem:[#allocation2] sm:$0xff] %v337
      %340 = vst [vmem:[#allocation2 + $0x8] sm:$0xff] %v338
    $region41: #{tpu_custom_call.1} parent=1 // pred_fallthru
      _
    // Predicated region
    $region42: #{tpu_custom_call.1} parent=1 // pred_check
      %p341 = pneg %p325
    $region43: #{tpu_custom_call.1} parent=1 // pred_check_branch
      %343 = sbr.rel (%p341) target = $region45
    $region44: #{tpu_custom_call.1} parent=1 // pred_region
      %v344 = vld [vmem:[#allocation2] sm:$0xff]
      %v345 = vld [vmem:[#allocation2 + $0x8] sm:$0xff]
      %v346 = vld [vmem:[%s4] sm:$0x1]
      %v348 = vperm.slane %v346, 0
      %v350 = vadd.f32 %v344, %v348
      %v351 = vadd.f32 %v345, %v348
      %352 = vst [vmem:[#allocation9] sm:$0xff] %v350
      %353 = vst [vmem:[#allocation9 + $0x8] sm:$0xff] %v351
    $region45: #{tpu_custom_call.1} parent=1 // pred_fallthru
      _
    // Predicated region
    $region46: #{tpu_custom_call.1} parent=1 // pred_check
      _
    $region47: #{tpu_custom_call.1} parent=1 // pred_check_branch
      %355 = sbr.rel (0) target = $region49
    $region48: #{tpu_custom_call.1} parent=1 // pred_region
      %357 = vsyncadd [#allocation5], 0
      %s358 = sshll.u32 [#allocation9], 4
      %s359 = int_to_ptr.vmem [resolvable:$true] %s358
      %s360 = sshll.u32 %s5, 4
      %s361 = int_to_ptr.hbm [resolvable:$true] %s360
      %366 = dma.vmem_to_hbm [thread:$0]  %s359, 256, %s361, [#allocation5], 128, 128, 8
    $region49: #{tpu_custom_call.1} parent=1 // pred_fallthru
      _
    // Predicated region
    $region50: #{tpu_custom_call.1} parent=1 // pred_check
      _
    $region51: #{tpu_custom_call.1} parent=1 // pred_check_branch
      %368 = sbr.rel (0) target = $region53
    $region52: #{tpu_custom_call.1} parent=1 // pred_region
      %370 = dma.done [#allocation5], 256
    $region53: #{tpu_custom_call.1} parent=1 // pred_fallthru
      _
    %371 = vsyncpa [#allocation4], 1
    %372 = vsyncpa [#allocation7], 1
    %373 = vsyncpa [#allocation5], 1

</llo_original>
